<compile_context>
chip_gen: v7x
topology: tpu7x:2x2x1
jax: 0.10.0
libtpu: 0.0.40
codegen_flags: <defaults>
</compile_context>

<pallas_src>
import functools

import jax
import jax.numpy as jnp
from jax.experimental import pallas as pl
from jax.experimental.pallas import tpu as pltpu

KH = KW = 3   # kernel_size = 3
PAD = 1       # padding = 1 (stride = 1, bias = False, matching the module)


def _dsconv_kernel(x_ref, dw_ref, pw_ref, o_ref, *, H, W):
    """Fused depthwise(3x3) + pointwise(1x1) for one batch element.

    x_ref : (1, Cin,  H*W)   input, spatial flattened onto lanes
    dw_ref: (Cin, KH*KW)     depthwise weights
    pw_ref: (Cout, Cin)      pointwise weights
    o_ref : (1, Cout, H*W)   output, spatial flattened onto lanes
    """
    cin = x_ref.shape[1]
    hw = x_ref.shape[2]

    x = x_ref[0].astype(jnp.float32)        # (Cin, HW)
    dw = dw_ref[...].astype(jnp.float32)    # (Cin, 9)

    # Flattened spatial index of every lane position (i = h*W + w).
    idx = jax.lax.broadcasted_iota(jnp.int32, (cin, hw), 1)
    if W & (W - 1) == 0:
        col = jnp.bitwise_and(idx, W - 1)   # i % W (power-of-two fast path)
    else:
        col = jax.lax.rem(idx, W)           # general W

    # Depthwise 3x3: 9 taps = static XLU lane rotations + boundary masks (VPU).
    acc = jnp.zeros((cin, hw), dtype=jnp.float32)
    for kh in range(KH):
        dh = kh - PAD
        for kw in range(KW):
            dc = kw - PAD
            shift = -(dh * W + dc)          # shifted[i] = x[i + dh*W + dc]
            shifted = x if shift == 0 else pltpu.roll(x, shift=shift % hw, axis=1)
            # Zero the taps whose 2-D source (h+dh, w+dc) falls outside the
            # image; this also covers every lane the rotation wrapped around.
            conds = []
            if dh == -1:
                conds.append(idx >= W)              # source row >= 0
            elif dh == 1:
                conds.append(idx < (H - 1) * W)     # source row <  H
            if dc == -1:
                conds.append(col >= 1)              # source col >= 0
            elif dc == 1:
                conds.append(col <= W - 2)          # source col <  W
            tap = shifted
            if conds:
                m = conds[0]
                for c in conds[1:]:
                    m = m & c
                tap = jnp.where(m, shifted, 0.0)
            k = kh * KW + kw
            acc = acc + tap * dw[:, k:k + 1]        # per-channel scale (lane bcast)

    # Pointwise 1x1 conv: (Cout, Cin) @ (Cin, HW) on the MXU; output stays
    # lane-dense (minor dim = HW).  f32 operands keep the tight tolerance of
    # the reference check; on v6e/v7x casting acc/pw to bf16 here trades a
    # small numerics change for a faster MXU path.
    out = jnp.dot(pw_ref[...].astype(jnp.float32), acc,
                  preferred_element_type=jnp.float32)       # (Cout, HW)
    o_ref[0] = out.astype(o_ref.dtype)


def depthwise_separable_conv(x_nchw, dw_weight, pw_weight):
    """x_nchw: (N, Cin, H, W); dw_weight: (Cin, 1, KH, KW); pw_weight: (Cout, Cin, 1, 1).
    Returns (N, Cout, H, W) — same semantics as the PyTorch module."""
    N, Cin, H, W = x_nchw.shape
    Cout = pw_weight.shape[0]
    HW = H * W

    # Only free (contiguous) reshapes on the hot path — no pad, no transpose.
    x_flat = x_nchw.reshape(N, Cin, HW)
    dw = dw_weight.reshape(Cin, KH * KW)
    pw = pw_weight.reshape(Cout, Cin)

    kernel = functools.partial(_dsconv_kernel, H=H, W=W)

    # VMEM budget derived from actual block sizes: double-buffered x/out blocks
    # + weights + in-kernel f32 temporaries, clamped to sane per-chip limits.
    blk_x = Cin * HW * 4
    blk_o = Cout * HW * 4
    est = 2 * (blk_x + blk_o) + (Cin * KH * KW + Cout * Cin) * 4 + 8 * blk_x
    vmem_limit = min(max(est, 16 * 1024 * 1024), 48 * 1024 * 1024)

    out_flat = pl.pallas_call(
        kernel,
        out_shape=jax.ShapeDtypeStruct((N, Cout, HW), x_nchw.dtype),
        grid_spec=pltpu.PrefetchScalarGridSpec(
            num_scalar_prefetch=0,
            grid=(N,),
            in_specs=[
                pl.BlockSpec((1, Cin, HW), lambda b: (b, 0, 0)),
                pl.BlockSpec((Cin, KH * KW), lambda b: (0, 0)),
                pl.BlockSpec((Cout, Cin), lambda b: (0, 0)),
            ],
            out_specs=pl.BlockSpec((1, Cout, HW), lambda b: (b, 0, 0)),
        ),
        compiler_params=pltpu.CompilerParams(
            dimension_semantics=("parallel",),
            vmem_limit_bytes=vmem_limit,
        ),
    )(x_flat, dw, pw)

    return out_flat.reshape(N, Cout, H, W)


def _reference(x_nchw, dw_weight, pw_weight):
    """Pure-JAX reference using lax convs (PyTorch NCHW semantics)."""
    Cin = x_nchw.shape[1]
    y = jax.lax.conv_general_dilated(
        x_nchw, dw_weight, window_strides=(1, 1), padding=((PAD, PAD), (PAD, PAD)),
        dimension_numbers=("NCHW", "OIHW", "NCHW"), feature_group_count=Cin)
    y = jax.lax.conv_general_dilated(
        y, pw_weight, window_strides=(1, 1), padding="VALID",
        dimension_numbers=("NCHW", "OIHW", "NCHW"))
    return y


if __name__ == "__main__":
    key = jax.random.PRNGKey(0)
    k_x, k_dw, k_pw = jax.random.split(key, 3)

    N, Cin, H, W = 2, 4, 16, 16
    Cout = 8

    x = jax.random.normal(k_x, (N, Cin, H, W), dtype=jnp.float32)
    # Deterministic synthetic parameters (shapes match the nn.Conv2d weights).
    dw_weight = jax.random.normal(k_dw, (Cin, 1, KH, KW), dtype=jnp.float32) * 0.1
    pw_weight = jax.random.normal(k_pw, (Cout, Cin, 1, 1), dtype=jnp.float32) * 0.1

    out = depthwise_separable_conv(x, dw_weight, pw_weight)
    out = jax.block_until_ready(out)

    ref = _reference(x, dw_weight, pw_weight)
    assert out.shape == (N, Cout, H, W)
    assert jnp.allclose(out, ref, atol=1e-4, rtol=1e-4), "mismatch vs reference"

    print("KERNEL_OK")
</pallas_src>

<mosaic_0001>
module attributes {stable_mosaic.version = 11 : i64} {
  func.func @_dsconv_kernel(%arg0: i32, %arg1: memref<1x4x256xf32, #tpu.memory_space<vmem>>, %arg2: memref<4x9xf32, #tpu.memory_space<vmem>>, %arg3: memref<8x4xf32, #tpu.memory_space<vmem>>, %arg4: memref<1x8x256xf32, #tpu.memory_space<vmem>>) attributes {dimension_semantics = [#tpu.dimension_semantics<parallel>], iteration_bounds = array<i64: 2>, scalar_prefetch = 0 : i64, scratch_operands = 0 : i64, tpu.core_type = #tpu.core_type<tc>, window_params = [{transform_indices = @transform_0, window_bounds = array<i64: 1, 4, 256>}, {pipeline_mode = #tpu.pipeline_mode<synchronous>, transform_indices = @transform_1, window_bounds = array<i64: 4, 9>}, {pipeline_mode = #tpu.pipeline_mode<synchronous>, transform_indices = @transform_2, window_bounds = array<i64: 8, 4>}, {transform_indices = @transform_3, window_bounds = array<i64: 1, 8, 256>}]} {
    %c0 = arith.constant 0 : index
    %c0_0 = arith.constant 0 : index
    %c0_1 = arith.constant 0 : index
    %0 = vector.load %arg1[%c0, %c0_0, %c0_1] : memref<1x4x256xf32, #tpu.memory_space<vmem>>, vector<1x4x256xf32>
    %1 = vector.shape_cast %0 : vector<1x4x256xf32> to vector<4x256xf32>
    %c0_2 = arith.constant 0 : index
    %c0_3 = arith.constant 0 : index
    %2 = vector.load %arg2[%c0_2, %c0_3] : memref<4x9xf32, #tpu.memory_space<vmem>>, vector<4x9xf32>
    %3 = tpu.iota {dimensions = array<i32: 1>} : vector<4x256xi32>
    %c15_i32 = arith.constant 15 : i32
    %4 = vector.broadcast %c15_i32 : i32 to vector<4x256xi32>
    %5 = arith.andi %3, %4 : vector<4x256xi32>
    %cst = arith.constant 0.000000e+00 : f32
    %6 = vector.broadcast %cst : f32 to vector<4x256xf32>
    %c17_i32 = arith.constant 17 : i32
    %7 = tpu.dynamic_rotate %1 by %c17_i32 dim 1 : vector<4x256xf32>, i32 -> vector<4x256xf32>
    %c16_i32 = arith.constant 16 : i32
    %8 = vector.broadcast %c16_i32 : i32 to vector<4x256xi32>
    %9 = arith.cmpi sge, %3, %8 : vector<4x256xi32>
    %c1_i32 = arith.constant 1 : i32
    %10 = vector.broadcast %c1_i32 : i32 to vector<4x256xi32>
    %11 = arith.cmpi sge, %5, %10 : vector<4x256xi32>
    %12 = arith.andi %9, %11 : vector<4x256xi1>
    %cst_4 = arith.constant 0.000000e+00 : f32
    %13 = vector.broadcast %cst_4 : f32 to vector<4x256xf32>
    %14 = arith.select %12, %7, %13 : vector<4x256xi1>, vector<4x256xf32>
    %15 = vector.extract_strided_slice %2 {offsets = [0, 0], sizes = [4, 1], strides = [1, 1]} : vector<4x9xf32> to vector<4x1xf32>
    %16 = vector.broadcast %15 : vector<4x1xf32> to vector<4x256xf32>
    %17 = arith.mulf %14, %16 : vector<4x256xf32>
    %18 = arith.addf %6, %17 : vector<4x256xf32>
    %c16_i32_5 = arith.constant 16 : i32
    %19 = tpu.dynamic_rotate %1 by %c16_i32_5 dim 1 : vector<4x256xf32>, i32 -> vector<4x256xf32>
    %c16_i32_6 = arith.constant 16 : i32
    %20 = vector.broadcast %c16_i32_6 : i32 to vector<4x256xi32>
    %21 = arith.cmpi sge, %3, %20 : vector<4x256xi32>
    %cst_7 = arith.constant 0.000000e+00 : f32
    %22 = vector.broadcast %cst_7 : f32 to vector<4x256xf32>
    %23 = arith.select %21, %19, %22 : vector<4x256xi1>, vector<4x256xf32>
    %24 = vector.extract_strided_slice %2 {offsets = [0, 1], sizes = [4, 1], strides = [1, 1]} : vector<4x9xf32> to vector<4x1xf32>
    %25 = vector.broadcast %24 : vector<4x1xf32> to vector<4x256xf32>
    %26 = arith.mulf %23, %25 : vector<4x256xf32>
    %27 = arith.addf %18, %26 : vector<4x256xf32>
    %c15_i32_8 = arith.constant 15 : i32
    %28 = tpu.dynamic_rotate %1 by %c15_i32_8 dim 1 : vector<4x256xf32>, i32 -> vector<4x256xf32>
    %c16_i32_9 = arith.constant 16 : i32
    %29 = vector.broadcast %c16_i32_9 : i32 to vector<4x256xi32>
    %30 = arith.cmpi sge, %3, %29 : vector<4x256xi32>
    %c14_i32 = arith.constant 14 : i32
    %31 = vector.broadcast %c14_i32 : i32 to vector<4x256xi32>
    %32 = arith.cmpi sle, %5, %31 : vector<4x256xi32>
    %33 = arith.andi %30, %32 : vector<4x256xi1>
    %cst_10 = arith.constant 0.000000e+00 : f32
    %34 = vector.broadcast %cst_10 : f32 to vector<4x256xf32>
    %35 = arith.select %33, %28, %34 : vector<4x256xi1>, vector<4x256xf32>
    %36 = vector.extract_strided_slice %2 {offsets = [0, 2], sizes = [4, 1], strides = [1, 1]} : vector<4x9xf32> to vector<4x1xf32>
    %37 = vector.broadcast %36 : vector<4x1xf32> to vector<4x256xf32>
    %38 = arith.mulf %35, %37 : vector<4x256xf32>
    %39 = arith.addf %27, %38 : vector<4x256xf32>
    %c1_i32_11 = arith.constant 1 : i32
    %40 = tpu.dynamic_rotate %1 by %c1_i32_11 dim 1 : vector<4x256xf32>, i32 -> vector<4x256xf32>
    %c1_i32_12 = arith.constant 1 : i32
    %41 = vector.broadcast %c1_i32_12 : i32 to vector<4x256xi32>
    %42 = arith.cmpi sge, %5, %41 : vector<4x256xi32>
    %cst_13 = arith.constant 0.000000e+00 : f32
    %43 = vector.broadcast %cst_13 : f32 to vector<4x256xf32>
    %44 = arith.select %42, %40, %43 : vector<4x256xi1>, vector<4x256xf32>
    %45 = vector.extract_strided_slice %2 {offsets = [0, 3], sizes = [4, 1], strides = [1, 1]} : vector<4x9xf32> to vector<4x1xf32>
    %46 = vector.broadcast %45 : vector<4x1xf32> to vector<4x256xf32>
    %47 = arith.mulf %44, %46 : vector<4x256xf32>
    %48 = arith.addf %39, %47 : vector<4x256xf32>
    %49 = vector.extract_strided_slice %2 {offsets = [0, 4], sizes = [4, 1], strides = [1, 1]} : vector<4x9xf32> to vector<4x1xf32>
    %50 = vector.broadcast %49 : vector<4x1xf32> to vector<4x256xf32>
    %51 = arith.mulf %1, %50 : vector<4x256xf32>
    %52 = arith.addf %48, %51 : vector<4x256xf32>
    %c255_i32 = arith.constant 255 : i32
    %53 = tpu.dynamic_rotate %1 by %c255_i32 dim 1 : vector<4x256xf32>, i32 -> vector<4x256xf32>
    %c14_i32_14 = arith.constant 14 : i32
    %54 = vector.broadcast %c14_i32_14 : i32 to vector<4x256xi32>
    %55 = arith.cmpi sle, %5, %54 : vector<4x256xi32>
    %cst_15 = arith.constant 0.000000e+00 : f32
    %56 = vector.broadcast %cst_15 : f32 to vector<4x256xf32>
    %57 = arith.select %55, %53, %56 : vector<4x256xi1>, vector<4x256xf32>
    %58 = vector.extract_strided_slice %2 {offsets = [0, 5], sizes = [4, 1], strides = [1, 1]} : vector<4x9xf32> to vector<4x1xf32>
    %59 = vector.broadcast %58 : vector<4x1xf32> to vector<4x256xf32>
    %60 = arith.mulf %57, %59 : vector<4x256xf32>
    %61 = arith.addf %52, %60 : vector<4x256xf32>
    %c241_i32 = arith.constant 241 : i32
    %62 = tpu.dynamic_rotate %1 by %c241_i32 dim 1 : vector<4x256xf32>, i32 -> vector<4x256xf32>
    %c240_i32 = arith.constant 240 : i32
    %63 = vector.broadcast %c240_i32 : i32 to vector<4x256xi32>
    %64 = arith.cmpi slt, %3, %63 : vector<4x256xi32>
    %c1_i32_16 = arith.constant 1 : i32
    %65 = vector.broadcast %c1_i32_16 : i32 to vector<4x256xi32>
    %66 = arith.cmpi sge, %5, %65 : vector<4x256xi32>
    %67 = arith.andi %64, %66 : vector<4x256xi1>
    %cst_17 = arith.constant 0.000000e+00 : f32
    %68 = vector.broadcast %cst_17 : f32 to vector<4x256xf32>
    %69 = arith.select %67, %62, %68 : vector<4x256xi1>, vector<4x256xf32>
    %70 = vector.extract_strided_slice %2 {offsets = [0, 6], sizes = [4, 1], strides = [1, 1]} : vector<4x9xf32> to vector<4x1xf32>
    %71 = vector.broadcast %70 : vector<4x1xf32> to vector<4x256xf32>
    %72 = arith.mulf %69, %71 : vector<4x256xf32>
    %73 = arith.addf %61, %72 : vector<4x256xf32>
    %c240_i32_18 = arith.constant 240 : i32
    %74 = tpu.dynamic_rotate %1 by %c240_i32_18 dim 1 : vector<4x256xf32>, i32 -> vector<4x256xf32>
    %c240_i32_19 = arith.constant 240 : i32
    %75 = vector.broadcast %c240_i32_19 : i32 to vector<4x256xi32>
    %76 = arith.cmpi slt, %3, %75 : vector<4x256xi32>
    %cst_20 = arith.constant 0.000000e+00 : f32
    %77 = vector.broadcast %cst_20 : f32 to vector<4x256xf32>
    %78 = arith.select %76, %74, %77 : vector<4x256xi1>, vector<4x256xf32>
    %79 = vector.extract_strided_slice %2 {offsets = [0, 7], sizes = [4, 1], strides = [1, 1]} : vector<4x9xf32> to vector<4x1xf32>
    %80 = vector.broadcast %79 : vector<4x1xf32> to vector<4x256xf32>
    %81 = arith.mulf %78, %80 : vector<4x256xf32>
    %82 = arith.addf %73, %81 : vector<4x256xf32>
    %c239_i32 = arith.constant 239 : i32
    %83 = tpu.dynamic_rotate %1 by %c239_i32 dim 1 : vector<4x256xf32>, i32 -> vector<4x256xf32>
    %c240_i32_21 = arith.constant 240 : i32
    %84 = vector.broadcast %c240_i32_21 : i32 to vector<4x256xi32>
    %85 = arith.cmpi slt, %3, %84 : vector<4x256xi32>
    %c14_i32_22 = arith.constant 14 : i32
    %86 = vector.broadcast %c14_i32_22 : i32 to vector<4x256xi32>
    %87 = arith.cmpi sle, %5, %86 : vector<4x256xi32>
    %88 = arith.andi %85, %87 : vector<4x256xi1>
    %cst_23 = arith.constant 0.000000e+00 : f32
    %89 = vector.broadcast %cst_23 : f32 to vector<4x256xf32>
    %90 = arith.select %88, %83, %89 : vector<4x256xi1>, vector<4x256xf32>
    %91 = vector.extract_strided_slice %2 {offsets = [0, 8], sizes = [4, 1], strides = [1, 1]} : vector<4x9xf32> to vector<4x1xf32>
    %92 = vector.broadcast %91 : vector<4x1xf32> to vector<4x256xf32>
    %93 = arith.mulf %90, %92 : vector<4x256xf32>
    %94 = arith.addf %82, %93 : vector<4x256xf32>
    %c0_24 = arith.constant 0 : index
    %c0_25 = arith.constant 0 : index
    %95 = vector.load %arg3[%c0_24, %c0_25] : memref<8x4xf32, #tpu.memory_space<vmem>>, vector<8x4xf32>
    %cst_26 = arith.constant dense<0.000000e+00> : vector<8x256xf32>
    %96 = tpu.matmul %95, %94, %cst_26 {dimension_numbers = #tpu.dot_dimension_numbers<[1], [0], [0], [1], [0, 0, 1, 1], [], []>} : vector<8x4xf32>, vector<4x256xf32>, vector<8x256xf32> -> vector<8x256xf32>
    %c0_27 = arith.constant 0 : index
    %c0_28 = arith.constant 0 : index
    %c0_29 = arith.constant 0 : index
    %97 = vector.load %arg4[%c0_27, %c0_28, %c0_29] : memref<1x8x256xf32, #tpu.memory_space<vmem>>, vector<1x8x256xf32>
    %98 = vector.shape_cast %97 : vector<1x8x256xf32> to vector<8x256xf32>
    %99 = vector.shape_cast %96 : vector<8x256xf32> to vector<1x8x256xf32>
    tpu.vector_store %arg4[%c0_27, %c0_28, %c0_29], %99 {strides = array<i32>} : memref<1x8x256xf32, #tpu.memory_space<vmem>>, vector<1x8x256xf32>,
    return
  }
  func.func @transform_0(%arg0: i32) -> (i32, i32, i32) {
    %c0_i32 = arith.constant 0 : i32
    %c0_i32_0 = arith.constant 0 : i32
    %c0_i32_1 = arith.constant 0 : i32
    return %arg0, %c0_i32, %c0_i32_0 : i32, i32, i32
  }
  func.func @transform_1(%arg0: i32) -> (i32, i32) {
    %c0_i32 = arith.constant 0 : i32
    %c0_i32_0 = arith.constant 0 : i32
    %c0_i32_1 = arith.constant 0 : i32
    return %c0_i32, %c0_i32_0 : i32, i32
  }
  func.func @transform_2(%arg0: i32) -> (i32, i32) {
    %c0_i32 = arith.constant 0 : i32
    %c0_i32_0 = arith.constant 0 : i32
    %c0_i32_1 = arith.constant 0 : i32
    return %c0_i32, %c0_i32_0 : i32, i32
  }
  func.func @transform_3(%arg0: i32) -> (i32, i32, i32) {
    %c0_i32 = arith.constant 0 : i32
    %c0_i32_0 = arith.constant 0 : i32
    %c0_i32_1 = arith.constant 0 : i32
    return %arg0, %c0_i32, %c0_i32_0 : i32, i32, i32
  }
}

</mosaic_0001>

<llo_original>
// kernel: tpu_custom_call.1
$region0: #{tpu_custom_call.1}
  #allocation0 [shape = 'u32[]', space=smem, size = 0x4, offset = 0x4, fixed_abs, tag = 'smem constant byte address 0x4 - core index']
  #allocation1 [shape = 'u32[144,128]{1,0:T(1,128)}', space=vmem, size = 0x12000, scoped, tag = 'internal scratch']
  %s0 = inlined_call_operand.hbm [shape: f32[2,4,256], index: 0, kind: input, shape index: {}]
  %s1 = inlined_call_operand.vmem [shape: f32[4,9], index: 1, kind: input, shape index: {}]
  %s2 = inlined_call_operand.vmem [shape: f32[8,4], index: 2, kind: input, shape index: {}]
  %s3 = inlined_call_operand.hbm [shape: f32[2,8,256], index: 3, kind: output, shape index: {}]
  %s4 = sld [smem:[#allocation0]]
  $region49: #{tpu_custom_call.1} parent=0
    _
  %s6 = ssub.s32 1, %s4
  %s7 = scalar_select 0, %s6, %s4
  $region1: #{tpu_custom_call.1} parent=0
    #allocation2 [shape = 'u8[8192]{0}', space=vmem, size = 0x2000, scoped, tag = 'input window, operand 0']
    #allocation3 [shape = 's32[2]{0}', space=sflag, size = 0x8, scoped, tag = 'scoped memory for tpu_custom_call.1']
    #allocation4 [shape = 's32[2]{0}', space=sflag, size = 0x8, scoped, tag = 'scoped memory for tpu_custom_call.1']
    #allocation5 [shape = 'u8[16384]{0}', space=vmem, size = 0x4000, scoped, tag = 'output window, operand 0']
    %8 = vsyncpa [#allocation3], 0
    %s9 = scalar_lea.sflag [#allocation3], 1
    %10 = vsyncpa %s9, 0
    %11 = vsyncpa [#allocation4], 0
    %s12 = scalar_lea.sflag [#allocation4], 1
    %13 = vsyncpa %s12, 0
    loop: start=0, step=1, limit=4
    $region2: #{tpu_custom_call.1} parent=1 // loop_pre_header
      _
    $region3: #{tpu_custom_call.1} parent=1 // loop_header
      %s15 = sphi 0, %s19
      %p16 = scmp.ge.s32.totalorder %s15, 4
      %s25 = sphi 0, %s27
      %s28 = sphi 0, %s25
      %s29 = sphi 0, %s28
      %s45 = sphi 0, %s29
      %s49 = sphi 0, %s49
      %s51 = sphi 0, %s49
      %s52 = sphi 0, %s51
      %s66 = sphi 0, %s52
      %s70 = sphi 0, %s70
      %s72 = sphi 0, %s70
      %s73 = sphi 0, %s72
      %s87 = sphi 0, %s73
      %s93 = sphi 0, %s95
      %s96 = sphi 0, %s93
      %s97 = sphi 0, %s96
      %s113 = sphi 0, %s97
    $region4: #{tpu_custom_call.1} parent=1 // loop_header_branch
      %18 = sbr.rel (%p16) target = $region8
    $region5: #{tpu_custom_call.1} parent=1 // loop_body
      %s20 = ssub.s32 %s15, 1
      %s21 = ssub.s32 %s15, 2
      %s22 = sadd.s32 %s15, 1
      %s23 = ssub.s32 %s15, %s22
      %p24 = scmp.eq.s32.totalorder %s23, 0
      %s26 = sadd.s32 %s25, 1
      %s27 = scalar_select %p24, %s25, %s26
      %p30 = pneg %p24
      %p31 = scmp.eq.s32.totalorder %s15, 1
      %p32 = por %p30, %p31
      %p33 = scmp.ne.s32.totalorder %s25, %s28
      %p34 = scmp.eq.s32.totalorder %s15, 0
      %p35 = por %p33, %p34
      %p36 = scmp.ne.s32.totalorder %s25, %s28
      %p37 = scmp.eq.s32.totalorder %s20, 1
      %p38 = por %p36, %p37
      %p39 = scmp.ne.s32.totalorder %s28, %s29
      %p40 = scmp.eq.s32.totalorder %s20, 0
      %p41 = por %p39, %p40
      %p42 = scmp.ne.s32.totalorder %s28, %s29
      %p43 = scmp.eq.s32.totalorder %s21, 1
      %p44 = por %p42, %p43
      %p46 = scmp.ne.s32.totalorder %s29, %s45
      %p47 = scmp.eq.s32.totalorder %s21, 0
      %p48 = por %p46, %p47
      %s50 = sadd.s32 %s49, 1
      %p53 = scmp.eq.s32.totalorder %s15, 1
      %p54 = scmp.ne.s32.totalorder %s49, %s51
      %p55 = scmp.eq.s32.totalorder %s15, 0
      %p56 = por %p54, %p55
      %p57 = scmp.ne.s32.totalorder %s49, %s51
      %p58 = scmp.eq.s32.totalorder %s20, 1
      %p59 = por %p57, %p58
      %p60 = scmp.ne.s32.totalorder %s51, %s52
      %p61 = scmp.eq.s32.totalorder %s20, 0
      %p62 = por %p60, %p61
      %p63 = scmp.ne.s32.totalorder %s51, %s52
      %p64 = scmp.eq.s32.totalorder %s21, 1
      %p65 = por %p63, %p64
      %p67 = scmp.ne.s32.totalorder %s52, %s66
      %p68 = scmp.eq.s32.totalorder %s21, 0
      %p69 = por %p67, %p68
      %s71 = sadd.s32 %s70, 1
      %p74 = scmp.eq.s32.totalorder %s15, 1
      %p75 = scmp.ne.s32.totalorder %s70, %s72
      %p76 = scmp.eq.s32.totalorder %s15, 0
      %p77 = por %p75, %p76
      %p78 = scmp.ne.s32.totalorder %s70, %s72
      %p79 = scmp.eq.s32.totalorder %s20, 1
      %p80 = por %p78, %p79
      %p81 = scmp.ne.s32.totalorder %s72, %s73
      %p82 = scmp.eq.s32.totalorder %s20, 0
      %p83 = por %p81, %p82
      %p84 = scmp.ne.s32.totalorder %s72, %s73
      %p85 = scmp.eq.s32.totalorder %s21, 1
      %p86 = por %p84, %p85
      %p88 = scmp.ne.s32.totalorder %s73, %s87
      %p89 = scmp.eq.s32.totalorder %s21, 0
      %p90 = por %p88, %p89
      %s91 = ssub.s32 %s15, %s22
      %p92 = scmp.eq.s32.totalorder %s91, 0
      %s94 = sadd.s32 %s93, 1
      %s95 = scalar_select %p92, %s93, %s94
      %p98 = pneg %p92
      %p99 = scmp.eq.s32.totalorder %s15, 1
      %p100 = por %p98, %p99
      %p101 = scmp.ne.s32.totalorder %s93, %s96
      %p102 = scmp.eq.s32.totalorder %s15, 0
      %p103 = por %p101, %p102
      %p104 = scmp.ne.s32.totalorder %s93, %s96
      %p105 = scmp.eq.s32.totalorder %s20, 1
      %p106 = por %p104, %p105
      %p107 = scmp.ne.s32.totalorder %s96, %s97
      %p108 = scmp.eq.s32.totalorder %s20, 0
      %p109 = por %p107, %p108
      %p110 = scmp.ne.s32.totalorder %s96, %s97
      %p111 = scmp.eq.s32.totalorder %s21, 1
      %p112 = por %p110, %p111
      %p114 = scmp.ne.s32.totalorder %s97, %s113
      %p115 = scmp.eq.s32.totalorder %s21, 0
      %p116 = por %p114, %p115
      %p117 = scmp.le.s32.totalorder 1, %s15
      %p118 = scmp.lt.s32.totalorder %s15, 3
      %p119 = pnand %p117, %p118
      %p120 = pneg %p119
      // Predicated region
      $region9: #{tpu_custom_call.1} parent=5 // pred_check
        _
      $region10: #{tpu_custom_call.1} parent=5 // pred_check_branch
        %122 = sbr.rel (%p119) target = $region12
      $region11: #{tpu_custom_call.1} parent=5 // pred_region
        %s123 = ssub.s32 %s15, 1
        // Predicated region
        $region13: #{tpu_custom_call.1} parent=11 // pred_check
          %p124 = pneg %p62
        $region14: #{tpu_custom_call.1} parent=11 // pred_check_branch
          %126 = sbr.rel (%p124) target = $region16
        $region15: #{tpu_custom_call.1} parent=11 // pred_region
          _
        $region16: #{tpu_custom_call.1} parent=11 // pred_fallthru
          _
        // Predicated region
        $region17: #{tpu_custom_call.1} parent=11 // pred_check
          %p127 = pneg %p83
        $region18: #{tpu_custom_call.1} parent=11 // pred_check_branch
          %129 = sbr.rel (%p127) target = $region20
        $region19: #{tpu_custom_call.1} parent=11 // pred_region
          _
        $region20: #{tpu_custom_call.1} parent=11 // pred_fallthru
          _
      $region12: #{tpu_custom_call.1} parent=5 // pred_fallthru
        _
      %p130 = scmp.lt.s32.totalorder %s15, 2
      // Predicated region
      $region21: #{tpu_custom_call.1} parent=5 // pred_check
        %p131 = pneg %p130
      $region22: #{tpu_custom_call.1} parent=5 // pred_check_branch
        %133 = sbr.rel (%p131) target = $region24
      $region23: #{tpu_custom_call.1} parent=5 // pred_region
        // Predicated region
        $region25: #{tpu_custom_call.1} parent=23 // pred_check
          %p134 = pneg %p35
        $region26: #{tpu_custom_call.1} parent=23 // pred_check_branch
          %136 = sbr.rel (%p134) target = $region28
        $region27: #{tpu_custom_call.1} parent=23 // pred_region
          %s137 = sand.u32 %s25, 1
          %s138 = scalar_lea.sflag [#allocation3], %s137
          %s139 = sand.u32 %s25, 1
          %s140 = smul.addr %s139, 8
          %s141 = scalar_lea.vmem [#allocation2], %s140
          %s143 = ssub.s32 128, 128
          %144 = vsyncadd %s138, %s143
          %s145 = smul.addr %s15, 2
          %s146 = smul.addr %s145, 64
          %s147 = scalar_lea.hbm %s0, %s146
          %s149 = sshll.u32 %s141, 4
          %s150 = int_to_ptr.vmem [resolvable:$true] %s149
          %152 = dma.hbm_to_vmem [thread:$0]  %s147, 128, %s150, %s138
        $region28: #{tpu_custom_call.1} parent=23 // pred_fallthru
          _
      $region24: #{tpu_custom_call.1} parent=5 // pred_fallthru
        _
      %p153 = scmp.le.s32.totalorder 1, %s15
      %p154 = scmp.lt.s32.totalorder %s15, 3
      %p155 = pnand %p153, %p154
      %p156 = pneg %p155
      // Predicated region
      $region29: #{tpu_custom_call.1} parent=5 // pred_check
        _
      $region30: #{tpu_custom_call.1} parent=5 // pred_check_branch
        %158 = sbr.rel (%p155) target = $region32
      $region31: #{tpu_custom_call.1} parent=5 // pred_region
        %s159 = ssub.s32 %s15, 1
        %s160 = sand.u32 %s28, 1
        %s161 = scalar_lea.sflag [#allocation3], %s160
        %s162 = sand.u32 %s28, 1
        %s163 = smul.addr %s162, 8
        %s164 = scalar_lea.vmem [#allocation2], %s163
        // Predicated region
        $region33: #{tpu_custom_call.1} parent=31 // pred_check
          %p165 = pneg %p41
        $region34: #{tpu_custom_call.1} parent=31 // pred_check_branch
          %167 = sbr.rel (%p165) target = $region36
        $region35: #{tpu_custom_call.1} parent=31 // pred_region
          %168 = dma.done %s161, 128
        $region36: #{tpu_custom_call.1} parent=31 // pred_fallthru
          _
        %s169 = sand.u32 %s28, 1
        %s170 = scalar_lea.sflag [#allocation3], %s169
        %s171 = sand.u32 %s28, 1
        %s172 = smul.addr %s171, 8
        %s173 = scalar_lea.vmem [#allocation2], %s172
        %p174 = pneg %p41
        %p175 = pneg %p38
        %p176 = pneg %p62
        %p177 = pneg %p59
        %p178 = pneg %p83
        %p179 = pneg %p80
        %p180 = pneg %p109
        %p181 = pneg %p106
        %s182 = sand.u32 %s96, 1
        %s183 = scalar_lea.sflag [#allocation4], %s182
        %s184 = sand.u32 %s96, 1
        %s185 = smul.addr %s184, 16
        %s186 = scalar_lea.vmem [#allocation5], %s185
        %v187 = vld [vmem:[%s164] sm:$0xff]
        %v188 = vld [vmem:[%s1] sm:$0xf]
        %v189 = vlaneseq
        %v190 = vand.u32 %v189, 127
        %v191 = vadd.s32 %v190, 128
        %v192 = vand.u32 %v190, 15
        %v193 = vand.u32 %v191, 15
        %v195 = vcombine.high %v187, %v187
        %197 = vrot.lane.b32.xlu0 %v187, 17
        %v198 = vpop.permute.xlu0 %197
        %199 = vrot.lane.b32.xlu0 %v195, 17
        %v200 = vpop.permute.xlu0 %199
        %vm201 = vcmp.lt.s32.totalorder %v190, 17
        %v202 = vsel %vm201, %v198, %v200
        %v203 = vsel %vm201, %v200, %v198
        %vm204 = vcmp.ge.s32.totalorder %v190, 16
        %vm205 = vcmp.ge.s32.totalorder %v191, 16
        %vm206 = vcmp.ge.s32.totalorder %v192, 1
        %vm207 = vcmp.ge.s32.totalorder %v193, 1
        %vm208 = vmand %vm204, %vm206
        %vm209 = vmand %vm205, %vm207
        %v210 = vsel %vm208, %v203, 0.0
        %v211 = vsel %vm209, %v202, 0.0
        %213 = vset.pattern.permute.xlu0 0
        %214 = vperm.xlu0 %213, %v188
        %v215 = vpop.permute.xlu0 %214
        %v217 = vmul.f32 %v210, %v215
        %v218 = vmul.f32 %v211, %v215
        %v219 = vadd.f32 %v217, 0.0
        %v220 = vadd.f32 %v218, 0.0
        %221 = vrot.lane.b32.xlu0 %v187, 16
        %v222 = vpop.permute.xlu0 %221
        %223 = vrot.lane.b32.xlu0 %v195, 16
        %v224 = vpop.permute.xlu0 %223
        %vm225 = vcmp.lt.s32.totalorder %v190, 16
        %v226 = vsel %vm225, %v222, %v224
        %v227 = vsel %vm225, %v224, %v222
        %v228 = vsel %vm204, %v227, 0.0
        %v229 = vsel %vm205, %v226, 0.0
        %230 = vset.pattern.permute.xlu0 1
        %231 = vperm.xlu0 %230, %v188
        %v232 = vpop.permute.xlu0 %231
        %v234 = vmul.f32 %v228, %v232
        %v235 = vmul.f32 %v229, %v232
        %v236 = vadd.f32 %v219, %v234
        %v237 = vadd.f32 %v220, %v235
        %238 = vrot.lane.b32.xlu0 %v187, 15
        %v239 = vpop.permute.xlu0 %238
        %240 = vrot.lane.b32.xlu0 %v195, 15
        %v241 = vpop.permute.xlu0 %240
        %vm242 = vcmp.lt.s32.totalorder %v190, 15
        %v243 = vsel %vm242, %v239, %v241
        %v244 = vsel %vm242, %v241, %v239
        %vm245 = vcmp.le.s32.totalorder %v192, 14
        %vm246 = vcmp.le.s32.totalorder %v193, 14
        %vm247 = vmand %vm204, %vm245
        %vm248 = vmand %vm205, %vm246
        %v249 = vsel %vm247, %v244, 0.0
        %v250 = vsel %vm248, %v243, 0.0
        %251 = vset.pattern.permute.xlu0 2
        %252 = vperm.xlu0 %251, %v188
        %v253 = vpop.permute.xlu0 %252
        %v255 = vmul.f32 %v249, %v253
        %v256 = vmul.f32 %v250, %v253
        %v257 = vadd.f32 %v236, %v255
        %v258 = vadd.f32 %v237, %v256
        %259 = vrot.lane.b32.xlu0 %v187, 1
        %v260 = vpop.permute.xlu0 %259
        %261 = vrot.lane.b32.xlu0 %v195, 1
        %v262 = vpop.permute.xlu0 %261
        %vm263 = vcmp.lt.s32.totalorder %v190, 1
        %v264 = vsel %vm263, %v260, %v262
        %v265 = vsel %vm263, %v262, %v260
        %v266 = vsel %vm206, %v265, 0.0
        %v267 = vsel %vm207, %v264, 0.0
        %268 = vset.pattern.permute.xlu0 3
        %269 = vperm.xlu0 %268, %v188
        %v270 = vpop.permute.xlu0 %269
        %v272 = vmul.f32 %v266, %v270
        %v273 = vmul.f32 %v267, %v270
        %v274 = vadd.f32 %v257, %v272
        %v275 = vadd.f32 %v258, %v273
        %276 = vset.pattern.permute.xlu0 4
        %277 = vperm.xlu0 %276, %v188
        %v278 = vpop.permute.xlu0 %277
        %v280 = vunpack.c.l.s4 839922192
        %v281 = vunpack.c.0.s8 %v280
        %v282 = vlaneseq
        %v283 = vshrl.u32 %v282, 7
        %v284 = vsub.s32 %v281, %v283
        %v285 = vrot.slane %v278, %v284
        %v287 = vmul.f32 %v187, %v285
        %v289 = vcombine.high %v287, %v287
        %v291 = vadd.f32 %v274, %v287
        %v292 = vadd.f32 %v275, %v289
        %293 = vrot.lane.b32.xlu0 %v187, 127
        %v294 = vpop.permute.xlu0 %293
        %295 = vrot.lane.b32.xlu0 %v195, 127
        %v296 = vpop.permute.xlu0 %295
        %vm297 = vcmp.lt.s32.totalorder %v190, 127
        %v298 = vsel %vm297, %v294, %v296
        %v299 = vsel %vm297, %v296, %v294
        %v300 = vsel %vm245, %v298, 0.0
        %v301 = vsel %vm246, %v299, 0.0
        %302 = vset.pattern.permute.xlu0 5
        %303 = vperm.xlu0 %302, %v188
        %v304 = vpop.permute.xlu0 %303
        %v306 = vmul.f32 %v300, %v304
        %v307 = vmul.f32 %v301, %v304
        %v308 = vadd.f32 %v291, %v306
        %v309 = vadd.f32 %v292, %v307
        %310 = vrot.lane.b32.xlu0 %v187, 113
        %v311 = vpop.permute.xlu0 %310
        %312 = vrot.lane.b32.xlu0 %v195, 113
        %v313 = vpop.permute.xlu0 %312
        %vm314 = vcmp.lt.s32.totalorder %v190, 113
        %v315 = vsel %vm314, %v311, %v313
        %v316 = vsel %vm314, %v313, %v311
        %vm317 = vcmp.lt.s32.totalorder %v190, 240
        %vm318 = vcmp.lt.s32.totalorder %v191, 240
        %vm319 = vmand %vm317, %vm206
        %vm320 = vmand %vm318, %vm207
        %v321 = vsel %vm319, %v315, 0.0
        %v322 = vsel %vm320, %v316, 0.0
        %323 = vset.pattern.permute.xlu0 6
        %324 = vperm.xlu0 %323, %v188
        %v325 = vpop.permute.xlu0 %324
        %v327 = vmul.f32 %v321, %v325
        %v328 = vmul.f32 %v322, %v325
        %v329 = vadd.f32 %v308, %v327
        %v330 = vadd.f32 %v309, %v328
        %331 = vrot.lane.b32.xlu0 %v187, 112
        %v332 = vpop.permute.xlu0 %331
        %333 = vrot.lane.b32.xlu0 %v195, 112
        %v334 = vpop.permute.xlu0 %333
        %vm335 = vcmp.lt.s32.totalorder %v190, 112
        %v336 = vsel %vm335, %v332, %v334
        %v337 = vsel %vm335, %v334, %v332
        %v338 = vsel %vm317, %v336, 0.0
        %v339 = vsel %vm318, %v337, 0.0
        %340 = vset.pattern.permute.xlu0 7
        %341 = vperm.xlu0 %340, %v188
        %v342 = vpop.permute.xlu0 %341
        %v344 = vmul.f32 %v338, %v342
        %v345 = vmul.f32 %v339, %v342
        %v346 = vadd.f32 %v329, %v344
        %v347 = vadd.f32 %v330, %v345
        %348 = vrot.lane.b32.xlu0 %v187, 111
        %v349 = vpop.permute.xlu0 %348
        %350 = vrot.lane.b32.xlu0 %v195, 111
        %v351 = vpop.permute.xlu0 %350
        %vm352 = vcmp.lt.s32.totalorder %v190, 111
        %v353 = vsel %vm352, %v349, %v351
        %v354 = vsel %vm352, %v351, %v349
        %vm355 = vmand %vm317, %vm245
        %vm356 = vmand %vm318, %vm246
        %v357 = vsel %vm355, %v353, 0.0
        %v358 = vsel %vm356, %v354, 0.0
        %359 = vset.pattern.permute.xlu0 8
        %360 = vperm.xlu0 %359, %v188
        %v361 = vpop.permute.xlu0 %360
        %v363 = vmul.f32 %v357, %v361
        %v364 = vmul.f32 %v358, %v361
        %v365 = vadd.f32 %v346, %v363
        %v366 = vadd.f32 %v347, %v364
        %v367 = vld [vmem:[%s2] sm:$0xff]
        %vm368 = vcmask 31744
        %v370 = vsel %vm368, %v367, 0
        %vm372 = vcmask 1043456
        %v374 = vsel %vm372, %v365, 0
        %v377 = vsel %vm372, %v366, 0
        %379 = vmatprep.subr.mxu0 %v377
        %380 = vmatpush1.msra.mxu0 %v374
        %381 = vmatprep.subr.mxu0 0.0
        %382 = vmatpush1.msra.mxu0 0.0
        %383 = vmatprep.subr.mxu0 0.0
        %384 = vmatpush1.msra.mxu0 0.0
        %385 = vmatprep.subr.mxu0 0.0
        %386 = vmatpush1.msra.mxu0 0.0
        %387 = vmatprep.subr.mxu0 0.0
        %388 = vmatpush1.msra.mxu0 0.0
        %389 = vmatprep.subr.mxu0 0.0
        %390 = vmatpush1.msra.mxu0 0.0
        %391 = vmatprep.subr.mxu0 0.0
        %392 = vmatpush1.msra.mxu0 0.0
        %393 = vmatprep.subr.mxu0 0.0
        %394 = vmatpush1.msra.mxu0 0.0
        %395 = vmatprep.subr.mxu0 0.0
        %396 = vmatpush1.msra.mxu0 0.0
        %397 = vmatprep.subr.mxu0 0.0
        %398 = vmatpush1.msra.mxu0 0.0
        %399 = vmatprep.subr.mxu0 0.0
        %400 = vmatpush1.msra.mxu0 0.0
        %401 = vmatprep.subr.mxu0 0.0
        %402 = vmatpush1.msra.mxu0 0.0
        %403 = vmatprep.subr.mxu0 0.0
        %404 = vmatpush1.msra.mxu0 0.0
        %405 = vmatprep.subr.mxu0 0.0
        %406 = vmatpush1.msra.mxu0 0.0
        %407 = vmatprep.subr.mxu0 0.0
        %408 = vmatpush1.msra.mxu0 0.0
        %409 = vmatprep.subr.mxu0 0.0
        %410 = vmatpush1.msra.mxu0 0.0
        %411 = vmatprep.subr.mxu0 0.0
        %412 = vmatpush1.msra.mxu0 0.0
        %413 = vmatprep.subr.mxu0 0.0
        %414 = vmatpush1.msra.mxu0 0.0
        %415 = vmatprep.subr.mxu0 0.0
        %416 = vmatpush1.msra.mxu0 0.0
        %417 = vmatprep.subr.mxu0 0.0
        %418 = vmatpush1.msra.mxu0 0.0
        %419 = vmatprep.subr.mxu0 0.0
        %420 = vmatpush1.msra.mxu0 0.0
        %421 = vmatprep.subr.mxu0 0.0
        %422 = vmatpush1.msra.mxu0 0.0
        %423 = vmatprep.subr.mxu0 0.0
        %424 = vmatpush1.msra.mxu0 0.0
        %425 = vmatprep.subr.mxu0 0.0
        %426 = vmatpush1.msra.mxu0 0.0
        %427 = vmatprep.subr.mxu0 0.0
        %428 = vmatpush1.msra.mxu0 0.0
        %429 = vmatprep.subr.mxu0 0.0
        %430 = vmatpush1.msra.mxu0 0.0
        %431 = vmatprep.subr.mxu0 0.0
        %432 = vmatpush1.msra.mxu0 0.0
        %433 = vmatprep.subr.mxu0 0.0
        %434 = vmatpush1.msra.mxu0 0.0
        %435 = vmatprep.subr.mxu0 0.0
        %436 = vmatpush1.msra.mxu0 0.0
        %437 = vmatprep.subr.mxu0 0.0
        %438 = vmatpush1.msra.mxu0 0.0
        %439 = vmatprep.subr.mxu0 0.0
        %440 = vmatpush1.msra.mxu0 0.0
        %441 = vmatprep.subr.mxu0 0.0
        %442 = vmatpush1.msra.mxu0 0.0
        %443 = vmatprep.mubr.f32.mxu0 0.0
        %444 = vmatmul.mubr.f32.gmra.mrb[0].mxu0 %v370
        %v445 = vpop.f32.mrb[0].mxu0
        %v446 = vadd.f32 0.0, %v445
        %v447 = vpop.f32.mrb[0].mxu0
        %v448 = vadd.f32 0.0, %v447
        %449 = vdwg.mxu0
        %450 = vst [vmem:[%s186] sm:$0xff] %v446
        %451 = vst [vmem:[%s186 + $0x8] sm:$0xff] %v448
        %s452 = sand.u32 %s96, 1
        %s453 = scalar_lea.sflag [#allocation4], %s452
        %s454 = sand.u32 %s96, 1
        %s455 = smul.addr %s454, 16
        %s456 = scalar_lea.vmem [#allocation5], %s455
        // Predicated region
        $region37: #{tpu_custom_call.1} parent=31 // pred_check
          %p457 = pneg %p106
        $region38: #{tpu_custom_call.1} parent=31 // pred_check_branch
          %459 = sbr.rel (%p457) target = $region40
        $region39: #{tpu_custom_call.1} parent=31 // pred_region
          %s461 = ssub.s32 256, 256
          %462 = vsyncadd %s453, %s461
          %s463 = smul.addr %s20, 2
          %s464 = smul.addr %s463, 128
          %s465 = scalar_lea.hbm %s3, %s464
          %s467 = sshll.u32 %s456, 4
          %s468 = int_to_ptr.vmem [resolvable:$true] %s467
          %470 = dma.vmem_to_hbm [thread:$0]  %s468, 256, %s465, %s453
        $region40: #{tpu_custom_call.1} parent=31 // pred_fallthru
          _
      $region32: #{tpu_custom_call.1} parent=5 // pred_fallthru
        _
      %p471 = scmp.le.s32.totalorder 2, %s15
      // Predicated region
      $region41: #{tpu_custom_call.1} parent=5 // pred_check
        %p472 = pneg %p471
      $region42: #{tpu_custom_call.1} parent=5 // pred_check_branch
        %474 = sbr.rel (%p472) target = $region44
      $region43: #{tpu_custom_call.1} parent=5 // pred_region
        %s475 = ssub.s32 %s15, 2
        // Predicated region
        $region45: #{tpu_custom_call.1} parent=43 // pred_check
          %p476 = pneg %p112
        $region46: #{tpu_custom_call.1} parent=43 // pred_check_branch
          %478 = sbr.rel (%p476) target = $region48
        $region47: #{tpu_custom_call.1} parent=43 // pred_region
          %s479 = sand.u32 %s97, 1
          %s480 = scalar_lea.sflag [#allocation4], %s479
          %s481 = sand.u32 %s97, 1
          %s482 = smul.addr %s481, 16
          %s483 = scalar_lea.vmem [#allocation5], %s482
          %484 = dma.done %s480, 256
        $region48: #{tpu_custom_call.1} parent=43 // pred_fallthru
          _
      $region44: #{tpu_custom_call.1} parent=5 // pred_fallthru
        _
    $region6: #{tpu_custom_call.1} parent=1 // loop_footer
      %s19 = sadd.s32 1, %s15
    $region7: #{tpu_custom_call.1} parent=1 // loop_footer_branch
      %14 = sbr.rel target = $region3
    $region8: #{tpu_custom_call.1} parent=1 // loop_exit
      _
    %485 = vsyncpa [#allocation3], 1
    %s486 = scalar_lea.sflag [#allocation3], 1
    %487 = vsyncpa %s486, 1
    %488 = vsyncpa [#allocation4], 1
    %s489 = scalar_lea.sflag [#allocation4], 1
    %490 = vsyncpa %s489, 1

</llo_original>
